<compile_context>
chip_gen: v7x
topology: tpu7x:2x2x1
jax: 0.10.0
libtpu: 0.0.40
codegen_flags: <defaults>
</compile_context>

<pallas_src>
import functools

import jax
import jax.numpy as jnp
from jax.experimental import pallas as pl
from jax.experimental.pallas import tpu as pltpu


def _expand_strokes(ysb, n_pnt, col_start, n_cols):
    """Expand per-stroke columns over their points with an exact 0/1 matmul.

    ysb: [Cout, n_stk] f32.  Returns [Cout, n_cols] f32 where global column
    c = col_start + local takes ysb[:, c // n_pnt]; columns past n_stk*n_pnt
    (spatial padding) come out as exactly 0 and are dropped by the wrapper.
    """
    n_stk = ysb.shape[-1]
    col = jax.lax.broadcasted_iota(jnp.int32, (n_stk, n_cols), 1) + col_start
    row = jax.lax.broadcasted_iota(jnp.int32, (n_stk, n_cols), 0)
    lo = row * n_pnt
    e = jnp.where((col >= lo) & (col < lo + n_pnt), jnp.float32(1.0), jnp.float32(0.0))
    return jnp.dot(ysb, e, preferred_element_type=jnp.float32)


def _sparse_to_dense_kernel(d_ref, ysb_ref, wd_ref, o_ref, *scratch,
                            n_pnt, hoist_expand):
    # d_ref  : [Cd, TM]       dense channels x flattened (stroke, point) tile (streamed)
    # ysb_ref: [Cout, n_stk]  scale*(Ws^T s)+shift, f32, resident per batch element
    # wd_ref : [Cout, Cd]     scale-folded conv weight for the dense channels (resident)
    # o_ref  : [Cout, TM]
    j = pl.program_id(1)
    tm = o_ref.shape[-1]

    # Dense contribution: the only per-tile MXU matmul (keeps the output lane-dense;
    # flipping operands to keep the tiny weight stationary would put Cout on lanes).
    y = jnp.dot(wd_ref[...], d_ref[...], preferred_element_type=jnp.float32)

    if hoist_expand:
        ys_exp_ref = scratch[0]                       # [Cout, M_pad] f32, persists across j
        @pl.when(j == 0)
        def _():                                      # once per batch element
            ys_exp_ref[...] = _expand_strokes(ysb_ref[...], n_pnt, 0,
                                              ys_exp_ref.shape[-1])
        start = j * tm
        if tm % 128 == 0:
            start = pl.multiple_of(start, 128)
        y = y + ys_exp_ref[:, pl.ds(start, tm)]       # pure VPU add in steady state
    else:
        # Single tile per batch element (or scratch would not fit): expand in place.
        y = y + _expand_strokes(ysb_ref[...], n_pnt, j * tm, tm)

    # LeakyReLU(0.2).  BN scale/shift already folded into wd / ysb; Dropout = identity (eval).
    y = jnp.maximum(y, 0.2 * y)
    o_ref[...] = y.astype(o_ref.dtype)


def _choose_spatial_tile(m, cd, cout, itemsize, budget_bytes, max_cols=4096):
    """Largest lane-dense spatial tile that fits the VMEM budget.

    Returns (tile, need_pad).  tile == -1 with need_pad=True means the caller must pad the
    spatial extent to a multiple of 128 first (prevents the one-giant-tile VMEM cliff)."""
    # per streamed column: double-buffered d block + double-buffered out block + f32 temps
    per_col = 2 * cd * itemsize + 2 * cout * itemsize + 2 * cout * 4
    cap = max(128, budget_bytes // max(per_col, 1))
    cap = min(cap, max_cols)          # beyond ~512-1024 cols we're at HBM roofline anyway
    if m <= cap:
        return m, False
    t = (cap // 128) * 128
    while t >= 128:
        if m % t == 0:
            return t, False
        t -= 128
    return -1, True


def sparse_to_dense(sparse_fea, dense_fea, params, *, spatial_tile=None,
                    vmem_limit_bytes=None):
    """sparse_fea: [bs, Cs, n_stk]; dense_fea: [bs, Cd, n_stk, n_pnt]
    returns [bs, Cout, n_stk, n_pnt] (Cout == Cd), same dtype as dense_fea."""
    bs, cd, n_stk, n_pnt = dense_fea.shape
    cout = params["wdT"].shape[0]
    m = n_stk * n_pnt
    in_dtype = dense_fea.dtype
    itemsize = jnp.dtype(in_dtype).itemsize

    # VMEM-aware budget: v7x has only 64 MiB per TensorCore; don't carry a 128 MiB tuning.
    try:
        vmem_cap = int(pltpu.get_tpu_info().vmem_capacity_bytes)
    except Exception:
        vmem_cap = 64 << 20
    if vmem_limit_bytes is None:
        vmem_limit_bytes = min(vmem_cap * 3 // 4, 32 << 20)   # also > v5e's 16 MiB default
    tile_budget = vmem_limit_bytes // 2

    # Tiny wrapper-side precompute (XLA): fold conv bias + BN(eval) into scale/shift, fold
    # scale into the weights, and fold shift + the whole sparse projection into a per-stroke
    # additive slab.  All f32; no HBM broadcast of the sparse stream.
    scale = params["scale"].reshape(-1).astype(jnp.float32)              # [Cout]
    shift = params["shift"].reshape(-1).astype(jnp.float32)              # [Cout]
    wd = (scale[:, None] * params["wdT"].astype(jnp.float32)).astype(in_dtype)   # [Cout, Cd]
    ws = params["wsT"].astype(jnp.float32)                               # [Cout, Cs]
    ysb = jnp.einsum("oc,bck->bok", ws, sparse_fea.astype(jnp.float32))  # [bs, Cout, n_stk]
    ysb = scale[None, :, None] * ysb + shift[None, :, None]              # f32, tiny

    # Layout glue is free: merge the two trailing contiguous dims (no transpose).
    d3 = dense_fea.reshape(bs, cd, m)

    # Spatial tiling (pad to a multiple of 128 only when no clean tile exists).
    if spatial_tile is None:
        tm, need_pad = _choose_spatial_tile(m, cd, cout, itemsize, tile_budget)
    else:
        tm, need_pad = spatial_tile, (m % spatial_tile != 0)
    m_pad = m
    if need_pad:
        m_pad = pl.cdiv(m, 128) * 128
        d3 = jnp.pad(d3, ((0, 0), (0, 0), (0, m_pad - m)))
        if spatial_tile is None:
            tm, _ = _choose_spatial_tile(m_pad, cd, cout, itemsize, tile_budget)
        else:
            tm = spatial_tile
    assert m_pad % tm == 0 and (tm == m_pad or tm % 128 == 0), (m, m_pad, tm)
    n_sp = m_pad // tm

    # Hoist the stroke->point expansion out of the tile loop when the per-batch [Cout, M]
    # f32 scratch (plus the transient 0/1 operand) comfortably fits the VMEM budget.
    hoist_expand = (n_sp > 1) and ((cout + 2 * n_stk) * m_pad * 4 <= tile_budget // 2)
    scratch_shapes = [pltpu.VMEM((cout, m_pad), jnp.float32)] if hoist_expand else []
    # j==0-guarded scratch init needs in-order visits on the owning core -> j "arbitrary";
    # the batch axis stays "parallel" and carries the v7x megacore split.
    dim_sem = ("parallel", "arbitrary") if hoist_expand else ("parallel", "parallel")

    kernel = functools.partial(_sparse_to_dense_kernel, n_pnt=n_pnt,
                               hoist_expand=hoist_expand)
    out = pl.pallas_call(
        kernel,
        out_shape=jax.ShapeDtypeStruct((bs, cout, m_pad), in_dtype),
        grid_spec=pltpu.PrefetchScalarGridSpec(
            num_scalar_prefetch=0,
            grid=(bs, n_sp),
            in_specs=[
                pl.BlockSpec((None, cd, tm), lambda b, j: (b, 0, j)),       # streamed dense
                pl.BlockSpec((None, cout, n_stk), lambda b, j: (b, 0, 0)),  # resident / batch
                pl.BlockSpec((cout, cd), lambda b, j: (0, 0)),              # resident weight
            ],
            out_specs=pl.BlockSpec((None, cout, tm), lambda b, j: (b, 0, j)),
            scratch_shapes=scratch_shapes,
        ),
        compiler_params=pltpu.CompilerParams(
            dimension_semantics=dim_sem,
            vmem_limit_bytes=vmem_limit_bytes,
        ),
    )(d3, ysb, wd)
    if m_pad != m:
        out = out[:, :, :m]
    return out.reshape(bs, cout, n_stk, n_pnt)


def make_params(key, sparse_in, dense_in):
    """Deterministic synthetic parameters for Conv2d(1x1) + BatchNorm2d (eval)."""
    cin, cout = sparse_in + dense_in, dense_in
    k1, k2, k3, k4, k5, k6 = jax.random.split(key, 6)
    # PyTorch Conv2d weight is [Cout, Cin, 1, 1]; stored here as [Cout, Cin] and split so the
    # dense channels come first (matches torch.cat([dense, sparse], dim=1)).
    w = jax.random.normal(k1, (cout, cin), jnp.float32) * (1.0 / jnp.sqrt(cin))
    b = jax.random.normal(k2, (cout,), jnp.float32) * 0.1
    gamma = 1.0 + 0.1 * jax.random.normal(k3, (cout,), jnp.float32)
    beta = 0.1 * jax.random.normal(k4, (cout,), jnp.float32)
    run_mean = 0.1 * jax.random.normal(k5, (cout,), jnp.float32)
    run_var = jnp.abs(1.0 + 0.1 * jax.random.normal(k6, (cout,), jnp.float32))
    eps = 1e-5
    scale = gamma / jnp.sqrt(run_var + eps)
    shift = (b - run_mean) * scale + beta
    return {
        "wdT": w[:, :dense_in],
        "wsT": w[:, dense_in:],
        "scale": scale,
        "shift": shift,
    }


def reference(sparse_fea, dense_fea, params):
    """Pure-JAX reference mirroring the PyTorch forward (eval mode)."""
    bs, cd, n_stk, n_pnt = dense_fea.shape
    s_b = jnp.broadcast_to(sparse_fea[:, :, :, None], sparse_fea.shape + (n_pnt,))
    x = jnp.concatenate([dense_fea, s_b], axis=1).astype(jnp.float32)
    w = jnp.concatenate([params["wdT"], params["wsT"]], axis=1).astype(jnp.float32)
    y = jnp.einsum("oc,bchw->bohw", w, x)
    y = y * params["scale"].reshape(1, -1, 1, 1) + params["shift"].reshape(1, -1, 1, 1)
    return jnp.where(y >= 0, y, 0.2 * y)


if __name__ == "__main__":
    key = jax.random.PRNGKey(0)

    # Case 1: small shapes, single spatial tile per batch element (M = 128).
    bs, sparse_in, dense_in, n_stk, n_pnt = 2, 16, 32, 8, 16
    k_s, k_d, k_p = jax.random.split(key, 3)
    sparse_fea = jax.random.normal(k_s, (bs, sparse_in, n_stk), jnp.float32)
    dense_fea = jax.random.normal(k_d, (bs, dense_in, n_stk, n_pnt), jnp.float32)
    params = make_params(k_p, sparse_in, dense_in)

    out = jax.block_until_ready(sparse_to_dense(sparse_fea, dense_fea, params))
    ref = reference(sparse_fea, dense_fea, params)
    assert out.shape == (bs, dense_in, n_stk, n_pnt)
    assert jnp.allclose(out, ref, atol=2e-4, rtol=2e-4)

    # Case 2: several spatial tiles -> exercises the hoisted per-batch expansion scratch
    # (@pl.when(j == 0) init + per-tile VPU add path).
    bs2, n_stk2, n_pnt2 = 2, 16, 32                       # M = 512, forced tile = 128
    k_s2, k_d2 = jax.random.split(jax.random.PRNGKey(1), 2)
    sparse2 = jax.random.normal(k_s2, (bs2, sparse_in, n_stk2), jnp.float32)
    dense2 = jax.random.normal(k_d2, (bs2, dense_in, n_stk2, n_pnt2), jnp.float32)
    out2 = jax.block_until_ready(
        sparse_to_dense(sparse2, dense2, params, spatial_tile=128))
    ref2 = reference(sparse2, dense2, params)
    assert jnp.allclose(out2, ref2, atol=2e-4, rtol=2e-4)

    # Case 3: bf16 inputs (halves HBM read/write bytes — the big lever on v5e);
    # MXU accumulation and epilogue stay in f32.
    s_bf = sparse_fea.astype(jnp.bfloat16)
    d_bf = dense_fea.astype(jnp.bfloat16)
    p_bf = dict(params,
                wdT=params["wdT"].astype(jnp.bfloat16),
                wsT=params["wsT"].astype(jnp.bfloat16))
    out_bf = jax.block_until_ready(sparse_to_dense(s_bf, d_bf, p_bf))
    ref_bf = reference(s_bf, d_bf, p_bf)
    assert out_bf.dtype == jnp.bfloat16
    assert jnp.allclose(out_bf.astype(jnp.float32), ref_bf, atol=5e-2, rtol=5e-2)

    # TODO(synk): eu.MLP internals are not given; assumed Conv2d(1x1)+BN2d(eval)
    # +LeakyReLU(0.2)+Dropout(eval=identity), matching the pure-JAX reference above.
    print("KERNEL_OK")
</pallas_src>

<mosaic_0001>
module attributes {stable_mosaic.version = 11 : i64} {
  func.func @_sparse_to_dense_kernel(%arg0: i32, %arg1: i32, %arg2: memref<1x32x128xf32, #tpu.memory_space<vmem>>, %arg3: memref<1x32x8xf32, #tpu.memory_space<vmem>>, %arg4: memref<32x32xf32, #tpu.memory_space<vmem>>, %arg5: memref<1x32x128xf32, #tpu.memory_space<vmem>>) attributes {dimension_semantics = [#tpu.dimension_semantics<parallel>, #tpu.dimension_semantics<parallel>], iteration_bounds = array<i64: 2, 1>, scalar_prefetch = 0 : i64, scratch_operands = 0 : i64, tpu.core_type = #tpu.core_type<tc>, window_params = [{transform_indices = @transform_0, window_bounds = array<i64: 1, 32, 128>}, {transform_indices = @transform_1, window_bounds = array<i64: 1, 32, 8>}, {pipeline_mode = #tpu.pipeline_mode<synchronous>, transform_indices = @transform_2, window_bounds = array<i64: 32, 32>}, {transform_indices = @transform_3, window_bounds = array<i64: 1, 32, 128>}]} {
    %c0 = arith.constant 0 : index
    %c0_0 = arith.constant 0 : index
    %0 = vector.load %arg4[%c0, %c0_0] : memref<32x32xf32, #tpu.memory_space<vmem>>, vector<32x32xf32>
    %c0_1 = arith.constant 0 : index
    %c0_2 = arith.constant 0 : index
    %c0_3 = arith.constant 0 : index
    %1 = vector.load %arg2[%c0_1, %c0_2, %c0_3] : memref<1x32x128xf32, #tpu.memory_space<vmem>>, vector<1x32x128xf32>
    %2 = vector.shape_cast %1 : vector<1x32x128xf32> to vector<32x128xf32>
    %cst = arith.constant dense<0.000000e+00> : vector<32x128xf32>
    %3 = tpu.matmul %0, %2, %cst {dimension_numbers = #tpu.dot_dimension_numbers<[1], [0], [0], [1], [0, 0, 1, 1], [], []>} : vector<32x32xf32>, vector<32x128xf32>, vector<32x128xf32> -> vector<32x128xf32>
    %c0_4 = arith.constant 0 : index
    %c0_5 = arith.constant 0 : index
    %c0_6 = arith.constant 0 : index
    %4 = vector.load %arg3[%c0_4, %c0_5, %c0_6] : memref<1x32x8xf32, #tpu.memory_space<vmem>>, vector<1x32x8xf32>
    %5 = vector.shape_cast %4 : vector<1x32x8xf32> to vector<32x8xf32>
    %c128_i32 = arith.constant 128 : i32
    %6 = arith.muli %arg1, %c128_i32 : i32
    %7 = tpu.iota {dimensions = array<i32: 1>} : vector<8x128xi32>
    %8 = vector.broadcast %6 : i32 to vector<8x128xi32>
    %9 = arith.addi %7, %8 : vector<8x128xi32>
    %10 = tpu.iota {dimensions = array<i32: 0>} : vector<8x128xi32>
    %c16_i32 = arith.constant 16 : i32
    %11 = vector.broadcast %c16_i32 : i32 to vector<8x128xi32>
    %12 = arith.muli %10, %11 : vector<8x128xi32>
    %13 = arith.cmpi sge, %9, %12 : vector<8x128xi32>
    %c16_i32_7 = arith.constant 16 : i32
    %14 = vector.broadcast %c16_i32_7 : i32 to vector<8x128xi32>
    %15 = arith.addi %12, %14 : vector<8x128xi32>
    %16 = arith.cmpi slt, %9, %15 : vector<8x128xi32>
    %17 = arith.andi %13, %16 : vector<8x128xi1>
    %cst_8 = arith.constant 1.000000e+00 : f32
    %cst_9 = arith.constant 0.000000e+00 : f32
    %18 = vector.broadcast %cst_8 : f32 to vector<8x128xf32>
    %19 = vector.broadcast %cst_9 : f32 to vector<8x128xf32>
    %20 = arith.select %17, %18, %19 : vector<8x128xi1>, vector<8x128xf32>
    %cst_10 = arith.constant dense<0.000000e+00> : vector<32x128xf32>
    %21 = tpu.matmul %5, %20, %cst_10 {dimension_numbers = #tpu.dot_dimension_numbers<[1], [0], [0], [1], [0, 0, 1, 1], [], []>} : vector<32x8xf32>, vector<8x128xf32>, vector<32x128xf32> -> vector<32x128xf32>
    %22 = arith.addf %3, %21 : vector<32x128xf32>
    %cst_11 = arith.constant 2.000000e-01 : f32
    %23 = vector.broadcast %cst_11 : f32 to vector<32x128xf32>
    %24 = arith.mulf %23, %22 : vector<32x128xf32>
    %25 = arith.maximumf %22, %24 : vector<32x128xf32>
    %c0_12 = arith.constant 0 : index
    %c0_13 = arith.constant 0 : index
    %c0_14 = arith.constant 0 : index
    %26 = vector.load %arg5[%c0_12, %c0_13, %c0_14] : memref<1x32x128xf32, #tpu.memory_space<vmem>>, vector<1x32x128xf32>
    %27 = vector.shape_cast %26 : vector<1x32x128xf32> to vector<32x128xf32>
    %28 = vector.shape_cast %25 : vector<32x128xf32> to vector<1x32x128xf32>
    tpu.vector_store %arg5[%c0_12, %c0_13, %c0_14], %28 {strides = array<i32>} : memref<1x32x128xf32, #tpu.memory_space<vmem>>, vector<1x32x128xf32>,
    return
  }
  func.func @transform_0(%arg0: i32, %arg1: i32) -> (i32, i32, i32) {
    %c0_i32 = arith.constant 0 : i32
    %c0_i32_0 = arith.constant 0 : i32
    return %arg0, %c0_i32, %arg1 : i32, i32, i32
  }
  func.func @transform_1(%arg0: i32, %arg1: i32) -> (i32, i32, i32) {
    %c0_i32 = arith.constant 0 : i32
    %c0_i32_0 = arith.constant 0 : i32
    %c0_i32_1 = arith.constant 0 : i32
    return %arg0, %c0_i32, %c0_i32_0 : i32, i32, i32
  }
  func.func @transform_2(%arg0: i32, %arg1: i32) -> (i32, i32) {
    %c0_i32 = arith.constant 0 : i32
    %c0_i32_0 = arith.constant 0 : i32
    %c0_i32_1 = arith.constant 0 : i32
    return %c0_i32, %c0_i32_0 : i32, i32
  }
  func.func @transform_3(%arg0: i32, %arg1: i32) -> (i32, i32, i32) {
    %c0_i32 = arith.constant 0 : i32
    %c0_i32_0 = arith.constant 0 : i32
    return %arg0, %c0_i32, %arg1 : i32, i32, i32
  }
}

</mosaic_0001>

<llo_original>
// kernel: tpu_custom_call.1
$region0: #{tpu_custom_call.1}
  #allocation0 [shape = 'u32[]', space=smem, size = 0x4, offset = 0x4, fixed_abs, tag = 'smem constant byte address 0x4 - core index']
  #allocation1 [shape = 'u32[144,128]{1,0:T(1,128)}', space=vmem, size = 0x12000, scoped, tag = 'internal scratch']
  %s0 = inlined_call_operand.vmem [shape: f32[2,32,128], index: 0, kind: input, shape index: {}]
  %s1 = inlined_call_operand.vmem [shape: f32[2,32,8], index: 1, kind: input, shape index: {}]
  %s2 = inlined_call_operand.hbm [shape: f32[32,32], index: 2, kind: input, shape index: {}]
  %s3 = inlined_call_operand.hbm [shape: f32[2,32,128], index: 3, kind: output, shape index: {}]
  %s4 = sld [smem:[#allocation0]]
  $region49: #{tpu_custom_call.1} parent=0
    _
  %s6 = ssub.s32 1, %s4
  %s7 = scalar_select 0, %s6, %s4
  $region1: #{tpu_custom_call.1} parent=0
    #allocation2 [shape = 'u8[16384]{0}', space=vmem, size = 0x4000, scoped, tag = 'input window, operand 2, single buffered']
    #allocation3 [shape = 's32[2]{0}', space=sflag, size = 0x8, scoped, tag = 'scoped memory for tpu_custom_call.1']
    #allocation4 [shape = 's32[2]{0}', space=sflag, size = 0x8, scoped, tag = 'scoped memory for tpu_custom_call.1']
    #allocation5 [shape = 'u8[32768]{0}', space=vmem, size = 0x8000, scoped, tag = 'output window, operand 0']
    %8 = vsyncpa [#allocation3], 0
    %9 = vsyncpa [#allocation4], 0
    %s10 = scalar_lea.sflag [#allocation4], 1
    %11 = vsyncpa %s10, 0
    loop: start=0, step=1, limit=4
    $region2: #{tpu_custom_call.1} parent=1 // loop_pre_header
      _
    $region3: #{tpu_custom_call.1} parent=1 // loop_header
      %s13 = sphi 0, %s17
      %p14 = scmp.ge.s32.totalorder %s13, 4
      %s20 = sphi 0, %s32
      %s21 = sphi 0, %s28
      %s22 = sphi 0, %s20
      %s23 = sphi 0, %s21
      %s24 = sphi 0, %s22
      %s25 = sphi 0, %s23
      %s37 = sphi 0, %s39
      %s40 = sphi 0, %s37
      %s41 = sphi 0, %s40
      %s57 = sphi 0, %s41
      %s63 = sphi 0, %s65
      %s66 = sphi 0, %s63
      %s67 = sphi 0, %s66
      %s83 = sphi 0, %s67
      %s87 = sphi 0, %s87
      %s89 = sphi 0, %s87
      %s90 = sphi 0, %s89
      %s104 = sphi 0, %s90
      %s112 = sphi 0, %s114
      %s115 = sphi 0, %s112
      %s116 = sphi 0, %s115
      %s132 = sphi 0, %s116
    $region4: #{tpu_custom_call.1} parent=1 // loop_header_branch
      %16 = sbr.rel (%p14) target = $region8
    $region5: #{tpu_custom_call.1} parent=1 // loop_body
      %s18 = ssub.s32 %s13, 1
      %s19 = ssub.s32 %s13, 2
      %s26 = sadd.s32 1, %s21
      %p27 = scmp.ge.s32.totalorder %s26, 1
      %s28 = scalar_select %p27, 0, %s26
      %s29 = sadd.s32 1, %s20
      %s30 = scalar_select %p27, %s29, %s20
      %p31 = scmp.ge.s32.totalorder %s30, 2
      %s32 = scalar_select %p31, 0, %s30
      %s33 = ssub.s32 %s20, %s32
      %s34 = ssub.s32 %s21, %s28
      %s35 = sor.u32 %s33, %s34
      %p36 = scmp.eq.s32.totalorder %s35, 0
      %s38 = sadd.s32 %s37, 1
      %s39 = scalar_select %p36, %s37, %s38
      %p42 = pneg %p36
      %p43 = scmp.eq.s32.totalorder %s13, 1
      %p44 = por %p42, %p43
      %p45 = scmp.ne.s32.totalorder %s37, %s40
      %p46 = scmp.eq.s32.totalorder %s13, 0
      %p47 = por %p45, %p46
      %p48 = scmp.ne.s32.totalorder %s37, %s40
      %p49 = scmp.eq.s32.totalorder %s18, 1
      %p50 = por %p48, %p49
      %p51 = scmp.ne.s32.totalorder %s40, %s41
      %p52 = scmp.eq.s32.totalorder %s18, 0
      %p53 = por %p51, %p52
      %p54 = scmp.ne.s32.totalorder %s40, %s41
      %p55 = scmp.eq.s32.totalorder %s19, 1
      %p56 = por %p54, %p55
      %p58 = scmp.ne.s32.totalorder %s41, %s57
      %p59 = scmp.eq.s32.totalorder %s19, 0
      %p60 = por %p58, %p59
      %s61 = ssub.s32 %s20, %s32
      %p62 = scmp.eq.s32.totalorder %s61, 0
      %s64 = sadd.s32 %s63, 1
      %s65 = scalar_select %p62, %s63, %s64
      %p68 = pneg %p62
      %p69 = scmp.eq.s32.totalorder %s13, 1
      %p70 = por %p68, %p69
      %p71 = scmp.ne.s32.totalorder %s63, %s66
      %p72 = scmp.eq.s32.totalorder %s13, 0
      %p73 = por %p71, %p72
      %p74 = scmp.ne.s32.totalorder %s63, %s66
      %p75 = scmp.eq.s32.totalorder %s18, 1
      %p76 = por %p74, %p75
      %p77 = scmp.ne.s32.totalorder %s66, %s67
      %p78 = scmp.eq.s32.totalorder %s18, 0
      %p79 = por %p77, %p78
      %p80 = scmp.ne.s32.totalorder %s66, %s67
      %p81 = scmp.eq.s32.totalorder %s19, 1
      %p82 = por %p80, %p81
      %p84 = scmp.ne.s32.totalorder %s67, %s83
      %p85 = scmp.eq.s32.totalorder %s19, 0
      %p86 = por %p84, %p85
      %s88 = sadd.s32 %s87, 1
      %p91 = scmp.eq.s32.totalorder %s13, 1
      %p92 = scmp.ne.s32.totalorder %s87, %s89
      %p93 = scmp.eq.s32.totalorder %s13, 0
      %p94 = por %p92, %p93
      %p95 = scmp.ne.s32.totalorder %s87, %s89
      %p96 = scmp.eq.s32.totalorder %s18, 1
      %p97 = por %p95, %p96
      %p98 = scmp.ne.s32.totalorder %s89, %s90
      %p99 = scmp.eq.s32.totalorder %s18, 0
      %p100 = por %p98, %p99
      %p101 = scmp.ne.s32.totalorder %s89, %s90
      %p102 = scmp.eq.s32.totalorder %s19, 1
      %p103 = por %p101, %p102
      %p105 = scmp.ne.s32.totalorder %s90, %s104
      %p106 = scmp.eq.s32.totalorder %s19, 0
      %p107 = por %p105, %p106
      %s108 = ssub.s32 %s20, %s32
      %s109 = ssub.s32 %s21, %s28
      %s110 = sor.u32 %s108, %s109
      %p111 = scmp.eq.s32.totalorder %s110, 0
      %s113 = sadd.s32 %s112, 1
      %s114 = scalar_select %p111, %s112, %s113
      %p117 = pneg %p111
      %p118 = scmp.eq.s32.totalorder %s13, 1
      %p119 = por %p117, %p118
      %p120 = scmp.ne.s32.totalorder %s112, %s115
      %p121 = scmp.eq.s32.totalorder %s13, 0
      %p122 = por %p120, %p121
      %p123 = scmp.ne.s32.totalorder %s112, %s115
      %p124 = scmp.eq.s32.totalorder %s18, 1
      %p125 = por %p123, %p124
      %p126 = scmp.ne.s32.totalorder %s115, %s116
      %p127 = scmp.eq.s32.totalorder %s18, 0
      %p128 = por %p126, %p127
      %p129 = scmp.ne.s32.totalorder %s115, %s116
      %p130 = scmp.eq.s32.totalorder %s19, 1
      %p131 = por %p129, %p130
      %p133 = scmp.ne.s32.totalorder %s116, %s132
      %p134 = scmp.eq.s32.totalorder %s19, 0
      %p135 = por %p133, %p134
      %p136 = scmp.le.s32.totalorder 1, %s13
      %p137 = scmp.lt.s32.totalorder %s13, 3
      %p138 = pnand %p136, %p137
      %p139 = pneg %p138
      // Predicated region
      $region9: #{tpu_custom_call.1} parent=5 // pred_check
        _
      $region10: #{tpu_custom_call.1} parent=5 // pred_check_branch
        %141 = sbr.rel (%p138) target = $region12
      $region11: #{tpu_custom_call.1} parent=5 // pred_region
        %s142 = ssub.s32 %s13, 1
        // Predicated region
        $region13: #{tpu_custom_call.1} parent=11 // pred_check
          %p143 = pneg %p100
        $region14: #{tpu_custom_call.1} parent=11 // pred_check_branch
          %145 = sbr.rel (%p143) target = $region16
        $region15: #{tpu_custom_call.1} parent=11 // pred_region
          %s147 = ssub.s32 512, 512
          %148 = vsyncadd [#allocation3], %s147
          %s149 = sshll.u32 [#allocation2], 4
          %s150 = int_to_ptr.vmem [resolvable:$true] %s149
          %155 = dma.hbm_to_vmem [thread:$0]  %s2, 512, %s150, [#allocation3], 128, 128, 8
        $region16: #{tpu_custom_call.1} parent=11 // pred_fallthru
          _
      $region12: #{tpu_custom_call.1} parent=5 // pred_fallthru
        _
      %p156 = scmp.lt.s32.totalorder %s13, 2
      // Predicated region
      $region17: #{tpu_custom_call.1} parent=5 // pred_check
        %p157 = pneg %p156
      $region18: #{tpu_custom_call.1} parent=5 // pred_check_branch
        %159 = sbr.rel (%p157) target = $region20
      $region19: #{tpu_custom_call.1} parent=5 // pred_region
        // Predicated region
        $region21: #{tpu_custom_call.1} parent=19 // pred_check
          %p160 = pneg %p47
        $region22: #{tpu_custom_call.1} parent=19 // pred_check_branch
          %162 = sbr.rel (%p160) target = $region24
        $region23: #{tpu_custom_call.1} parent=19 // pred_region
          %p163 = scmp.lt.s32.totalorder %s20, 1
          %s164 = scalar_select %p163, %s20, 1
          %p165 = scmp.lt.s32.totalorder %s21, 0
          %s166 = scalar_select %p165, %s21, 0
          %s167 = smul.addr %s164, 4
          %s168 = sadd.s32 %s166, %s167
          %s169 = smul.addr %s168, 8
          %s170 = scalar_lea.vmem %s0, %s169
        $region24: #{tpu_custom_call.1} parent=19 // pred_fallthru
          _
        // Predicated region
        $region25: #{tpu_custom_call.1} parent=19 // pred_check
          %p171 = pneg %p73
        $region26: #{tpu_custom_call.1} parent=19 // pred_check_branch
          %173 = sbr.rel (%p171) target = $region28
        $region27: #{tpu_custom_call.1} parent=19 // pred_region
          %p174 = scmp.lt.s32.totalorder %s20, 1
          %s175 = scalar_select %p174, %s20, 1
          %s176 = smul.addr %s175, 4
          %s177 = smul.addr %s176, 8
          %s178 = scalar_lea.vmem %s1, %s177
        $region28: #{tpu_custom_call.1} parent=19 // pred_fallthru
          _
      $region20: #{tpu_custom_call.1} parent=5 // pred_fallthru
        _
      %p179 = scmp.le.s32.totalorder 1, %s13
      %p180 = scmp.lt.s32.totalorder %s13, 3
      %p181 = pnand %p179, %p180
      %p182 = pneg %p181
      // Predicated region
      $region29: #{tpu_custom_call.1} parent=5 // pred_check
        _
      $region30: #{tpu_custom_call.1} parent=5 // pred_check_branch
        %184 = sbr.rel (%p181) target = $region32
      $region31: #{tpu_custom_call.1} parent=5 // pred_region
        %s185 = ssub.s32 %s13, 1
        // Predicated region
        $region33: #{tpu_custom_call.1} parent=31 // pred_check
          %p186 = pneg %p100
        $region34: #{tpu_custom_call.1} parent=31 // pred_check_branch
          %188 = sbr.rel (%p186) target = $region36
        $region35: #{tpu_custom_call.1} parent=31 // pred_region
          %189 = dma.done [#allocation3], 512
        $region36: #{tpu_custom_call.1} parent=31 // pred_fallthru
          _
        %p190 = scmp.lt.s32.totalorder %s22, 1
        %s191 = scalar_select %p190, %s22, 1
        %p192 = scmp.lt.s32.totalorder %s23, 0
        %s193 = scalar_select %p192, %s23, 0
        %s194 = smul.addr %s191, 4
        %s195 = sadd.s32 %s193, %s194
        %s196 = smul.addr %s195, 8
        %s197 = scalar_lea.vmem %s0, %s196
        %p198 = pneg %p53
        %p199 = pneg %p50
        %p200 = scmp.lt.s32.totalorder %s22, 1
        %s201 = scalar_select %p200, %s22, 1
        %s202 = smul.addr %s201, 4
        %s203 = smul.addr %s202, 8
        %s204 = scalar_lea.vmem %s1, %s203
        %p205 = pneg %p79
        %p206 = pneg %p76
        %p207 = pneg %p100
        %p208 = pneg %p97
        %p209 = pneg %p128
        %p210 = pneg %p125
        %s211 = sand.u32 %s115, 1
        %s212 = scalar_lea.sflag [#allocation4], %s211
        %s213 = sand.u32 %s115, 1
        %s214 = smul.addr %s213, 32
        %s215 = scalar_lea.vmem [#allocation5], %s214
        %p216 = scmp.lt.s32.totalorder %s22, 1
        %s217 = scalar_select %p216, %s22, 1
        %p218 = scmp.lt.s32.totalorder %s23, 0
        %s219 = scalar_select %p218, %s23, 0
        %s220 = smul.addr %s217, 4
        %s221 = sadd.s32 %s219, %s220
        %s222 = smul.addr %s221, 8
        %s223 = scalar_lea.vmem %s0, %s222
        %p224 = scmp.lt.s32.totalorder %s22, 1
        %s225 = scalar_select %p224, %s22, 1
        %s226 = smul.addr %s225, 4
        %s227 = smul.addr %s226, 8
        %s228 = scalar_lea.vmem %s1, %s227
        %v229 = vld [vmem:[#allocation2] sm:$0xff]
        %v230 = vld [vmem:[#allocation2 + $0x8] sm:$0xff]
        %v231 = vld [vmem:[#allocation2 + $0x10] sm:$0xff]
        %v232 = vld [vmem:[#allocation2 + $0x18] sm:$0xff]
        %v233 = vld [vmem:[%s223] sm:$0xff]
        %v234 = vld [vmem:[%s223 + $0x8] sm:$0xff]
        %v235 = vld [vmem:[%s223 + $0x10] sm:$0xff]
        %v236 = vld [vmem:[%s223 + $0x18] sm:$0xff]
        %v237 = vld [vmem:[%s228] sm:$0xff]
        %v238 = vld [vmem:[%s228 + $0x8] sm:$0xff]
        %v239 = vld [vmem:[%s228 + $0x10] sm:$0xff]
        %v240 = vld [vmem:[%s228 + $0x18] sm:$0xff]
        %s241 = smul.u32 %s23, 128
        %v242 = vlaneseq
        %v243 = vand.u32 %v242, 127
        %v244 = vstv %s241
        %v245 = vadd.s32 %v243, %v244
        %v246 = vlaneseq
        %v247 = vshrl.u32 %v246, 7
        %v248 = vmul.u32 %v247, 16
        %vm249 = vcmp.ge.s32.totalorder %v245, %v248
        %v250 = vadd.s32 %v248, 16
        %vm251 = vcmp.lt.s32.totalorder %v245, %v250
        %vm252 = vmand %vm249, %vm251
        %v253 = vsel %vm252, 1.0, 0.0
        %vm254 = vcmask 64512
        %v256 = vsel %vm254, %v237, 0
        %v259 = vsel %vm254, %v238, 0
        %v262 = vsel %vm254, %v239, 0
        %v265 = vsel %vm254, %v240, 0
        %267 = vmatprep.subr.mxu0 0.0
        %268 = vmatpush1.msra.mxu0 %v253
        %269 = vmatprep.subr.mxu0 0.0
        %270 = vmatpush1.msra.mxu0 0.0
        %271 = vmatprep.subr.mxu0 0.0
        %272 = vmatpush1.msra.mxu0 0.0
        %273 = vmatprep.subr.mxu0 0.0
        %274 = vmatpush1.msra.mxu0 0.0
        %275 = vmatprep.subr.mxu0 0.0
        %276 = vmatpush1.msra.mxu0 0.0
        %277 = vmatprep.subr.mxu0 0.0
        %278 = vmatpush1.msra.mxu0 0.0
        %279 = vmatprep.subr.mxu0 0.0
        %280 = vmatpush1.msra.mxu0 0.0
        %281 = vmatprep.subr.mxu0 0.0
        %282 = vmatpush1.msra.mxu0 0.0
        %283 = vmatprep.subr.mxu0 0.0
        %284 = vmatpush1.msra.mxu0 0.0
        %285 = vmatprep.subr.mxu0 0.0
        %286 = vmatpush1.msra.mxu0 0.0
        %287 = vmatprep.subr.mxu0 0.0
        %288 = vmatpush1.msra.mxu0 0.0
        %289 = vmatprep.subr.mxu0 0.0
        %290 = vmatpush1.msra.mxu0 0.0
        %291 = vmatprep.subr.mxu0 0.0
        %292 = vmatpush1.msra.mxu0 0.0
        %293 = vmatprep.subr.mxu0 0.0
        %294 = vmatpush1.msra.mxu0 0.0
        %295 = vmatprep.subr.mxu0 0.0
        %296 = vmatpush1.msra.mxu0 0.0
        %297 = vmatprep.subr.mxu0 0.0
        %298 = vmatpush1.msra.mxu0 0.0
        %299 = vmatprep.subr.mxu0 0.0
        %300 = vmatpush1.msra.mxu0 0.0
        %301 = vmatprep.subr.mxu0 0.0
        %302 = vmatpush1.msra.mxu0 0.0
        %303 = vmatprep.subr.mxu0 0.0
        %304 = vmatpush1.msra.mxu0 0.0
        %305 = vmatprep.subr.mxu0 0.0
        %306 = vmatpush1.msra.mxu0 0.0
        %307 = vmatprep.subr.mxu0 0.0
        %308 = vmatpush1.msra.mxu0 0.0
        %309 = vmatprep.subr.mxu0 0.0
        %310 = vmatpush1.msra.mxu0 0.0
        %311 = vmatprep.subr.mxu0 0.0
        %312 = vmatpush1.msra.mxu0 0.0
        %313 = vmatprep.subr.mxu0 0.0
        %314 = vmatpush1.msra.mxu0 0.0
        %315 = vmatprep.subr.mxu0 0.0
        %316 = vmatpush1.msra.mxu0 0.0
        %317 = vmatprep.subr.mxu0 0.0
        %318 = vmatpush1.msra.mxu0 0.0
        %319 = vmatprep.subr.mxu0 0.0
        %320 = vmatpush1.msra.mxu0 0.0
        %321 = vmatprep.subr.mxu0 0.0
        %322 = vmatpush1.msra.mxu0 0.0
        %323 = vmatprep.subr.mxu0 0.0
        %324 = vmatpush1.msra.mxu0 0.0
        %325 = vmatprep.subr.mxu0 0.0
        %326 = vmatpush1.msra.mxu0 0.0
        %327 = vmatprep.subr.mxu0 0.0
        %328 = vmatpush1.msra.mxu0 0.0
        %329 = vmatprep.subr.mxu0 0.0
        %330 = vmatpush1.msra.mxu0 0.0
        %331 = vmatprep.mubr.f32.mxu0 0.0
        %332 = vmatmul.mubr.f32.gmra.mrb[0].mxu0 %v256
        %v333 = vpop.f32.mrb[0].mxu0
        %v334 = vadd.f32 0.0, %v333
        %v335 = vpop.f32.mrb[0].mxu0
        %336 = vmatprep.mubr.f32.mxu0 0.0
        %337 = vmatmul.mubr.f32.gmra.mrb[0].mxu0 %v259
        %v338 = vpop.f32.mrb[0].mxu0
        %v339 = vadd.f32 0.0, %v338
        %v340 = vpop.f32.mrb[0].mxu0
        %341 = vmatprep.mubr.f32.mxu0 0.0
        %342 = vmatmul.mubr.f32.gmra.mrb[0].mxu0 %v262
        %v343 = vpop.f32.mrb[0].mxu0
        %v344 = vadd.f32 0.0, %v343
        %v345 = vpop.f32.mrb[0].mxu0
        %346 = vmatprep.mubr.f32.mxu0 0.0
        %347 = vmatmul.mubr.f32.gmra.mrb[0].mxu0 %v265
        %v348 = vpop.f32.mrb[0].mxu0
        %v349 = vadd.f32 0.0, %v348
        %v350 = vpop.f32.mrb[0].mxu0
        %351 = vdwg.mxu0
        %vm352 = vcmask 261120
        %v354 = vsel %vm352, %v229, 0
        %v357 = vsel %vm352, %v230, 0
        %v360 = vsel %vm352, %v231, 0
        %v363 = vsel %vm352, %v232, 0
        %365 = vmatprep.subr.mxu0 0.0
        %366 = vmatpush1.msra.mxu0 %v233
        %367 = vmatprep.subr.mxu0 0.0
        %368 = vmatpush1.msra.mxu0 %v234
        %369 = vmatprep.subr.mxu0 0.0
        %370 = vmatpush1.msra.mxu0 %v235
        %371 = vmatprep.subr.mxu0 0.0
        %372 = vmatpush1.msra.mxu0 %v236
        %373 = vmatprep.subr.mxu0 0.0
        %374 = vmatpush1.msra.mxu0 0.0
        %375 = vmatprep.subr.mxu0 0.0
        %376 = vmatpush1.msra.mxu0 0.0
        %377 = vmatprep.subr.mxu0 0.0
        %378 = vmatpush1.msra.mxu0 0.0
        %379 = vmatprep.subr.mxu0 0.0
        %380 = vmatpush1.msra.mxu0 0.0
        %381 = vmatprep.subr.mxu0 0.0
        %382 = vmatpush1.msra.mxu0 0.0
        %383 = vmatprep.subr.mxu0 0.0
        %384 = vmatpush1.msra.mxu0 0.0
        %385 = vmatprep.subr.mxu0 0.0
        %386 = vmatpush1.msra.mxu0 0.0
        %387 = vmatprep.subr.mxu0 0.0
        %388 = vmatpush1.msra.mxu0 0.0
        %389 = vmatprep.subr.mxu0 0.0
        %390 = vmatpush1.msra.mxu0 0.0
        %391 = vmatprep.subr.mxu0 0.0
        %392 = vmatpush1.msra.mxu0 0.0
        %393 = vmatprep.subr.mxu0 0.0
        %394 = vmatpush1.msra.mxu0 0.0
        %395 = vmatprep.subr.mxu0 0.0
        %396 = vmatpush1.msra.mxu0 0.0
        %397 = vmatprep.subr.mxu0 0.0
        %398 = vmatpush1.msra.mxu0 0.0
        %399 = vmatprep.subr.mxu0 0.0
        %400 = vmatpush1.msra.mxu0 0.0
        %401 = vmatprep.subr.mxu0 0.0
        %402 = vmatpush1.msra.mxu0 0.0
        %403 = vmatprep.subr.mxu0 0.0
        %404 = vmatpush1.msra.mxu0 0.0
        %405 = vmatprep.subr.mxu0 0.0
        %406 = vmatpush1.msra.mxu0 0.0
        %407 = vmatprep.subr.mxu0 0.0
        %408 = vmatpush1.msra.mxu0 0.0
        %409 = vmatprep.subr.mxu0 0.0
        %410 = vmatpush1.msra.mxu0 0.0
        %411 = vmatprep.subr.mxu0 0.0
        %412 = vmatpush1.msra.mxu0 0.0
        %413 = vmatprep.subr.mxu0 0.0
        %414 = vmatpush1.msra.mxu0 0.0
        %415 = vmatprep.subr.mxu0 0.0
        %416 = vmatpush1.msra.mxu0 0.0
        %417 = vmatprep.subr.mxu0 0.0
        %418 = vmatpush1.msra.mxu0 0.0
        %419 = vmatprep.subr.mxu0 0.0
        %420 = vmatpush1.msra.mxu0 0.0
        %421 = vmatprep.subr.mxu0 0.0
        %422 = vmatpush1.msra.mxu0 0.0
        %423 = vmatprep.subr.mxu0 0.0
        %424 = vmatpush1.msra.mxu0 0.0
        %425 = vmatprep.subr.mxu0 0.0
        %426 = vmatpush1.msra.mxu0 0.0
        %427 = vmatprep.subr.mxu0 0.0
        %428 = vmatpush1.msra.mxu0 0.0
        %429 = vmatprep.mubr.f32.mxu0 0.0
        %430 = vmatmul.mubr.f32.gmra.mrb[0].mxu0 %v354
        %v431 = vpop.f32.mrb[0].mxu0
        %v432 = vadd.f32 %v334, %v431
        %v433 = vpop.f32.mrb[0].mxu0
        %434 = vmatprep.mubr.f32.mxu0 0.0
        %435 = vmatmul.mubr.f32.gmra.mrb[0].mxu0 %v357
        %v436 = vpop.f32.mrb[0].mxu0
        %v437 = vadd.f32 %v339, %v436
        %v438 = vpop.f32.mrb[0].mxu0
        %439 = vmatprep.mubr.f32.mxu0 0.0
        %440 = vmatmul.mubr.f32.gmra.mrb[0].mxu0 %v360
        %v441 = vpop.f32.mrb[0].mxu0
        %v442 = vadd.f32 %v344, %v441
        %v443 = vpop.f32.mrb[0].mxu0
        %444 = vmatprep.mubr.f32.mxu0 0.0
        %445 = vmatmul.mubr.f32.gmra.mrb[0].mxu0 %v363
        %v446 = vpop.f32.mrb[0].mxu0
        %v447 = vadd.f32 %v349, %v446
        %v448 = vpop.f32.mrb[0].mxu0
        %449 = vdwg.mxu0
        %v450 = vmul.f32 %v432, 0.2
        %v451 = vmul.f32 %v437, 0.2
        %v452 = vmul.f32 %v442, 0.2
        %v453 = vmul.f32 %v447, 0.2
        %v454 = vmax.f32 %v432, %v450
        %v455 = vmax.f32 %v437, %v451
        %v456 = vmax.f32 %v442, %v452
        %v457 = vmax.f32 %v447, %v453
        %458 = vst [vmem:[%s215] sm:$0xff] %v454
        %459 = vst [vmem:[%s215 + $0x8] sm:$0xff] %v455
        %460 = vst [vmem:[%s215 + $0x10] sm:$0xff] %v456
        %461 = vst [vmem:[%s215 + $0x18] sm:$0xff] %v457
        %s462 = sand.u32 %s115, 1
        %s463 = scalar_lea.sflag [#allocation4], %s462
        %s464 = sand.u32 %s115, 1
        %s465 = smul.addr %s464, 32
        %s466 = scalar_lea.vmem [#allocation5], %s465
        // Predicated region
        $region37: #{tpu_custom_call.1} parent=31 // pred_check
          %p467 = pneg %p125
        $region38: #{tpu_custom_call.1} parent=31 // pred_check_branch
          %469 = sbr.rel (%p467) target = $region40
        $region39: #{tpu_custom_call.1} parent=31 // pred_region
          %s471 = ssub.s32 512, 512
          %472 = vsyncadd %s463, %s471
          %s473 = smul.addr %s22, 4
          %s474 = sadd.s32 %s23, %s473
          %s475 = smul.addr %s474, 128
          %s476 = scalar_lea.hbm %s3, %s475
          %s477 = sshll.u32 %s466, 4
          %s478 = int_to_ptr.vmem [resolvable:$true] %s477
          %483 = dma.vmem_to_hbm [thread:$0]  %s478, 512, %s476, %s463, 128, 128, 8
        $region40: #{tpu_custom_call.1} parent=31 // pred_fallthru
          _
      $region32: #{tpu_custom_call.1} parent=5 // pred_fallthru
        _
      %p484 = scmp.le.s32.totalorder 2, %s13
      // Predicated region
      $region41: #{tpu_custom_call.1} parent=5 // pred_check
        %p485 = pneg %p484
      $region42: #{tpu_custom_call.1} parent=5 // pred_check_branch
        %487 = sbr.rel (%p485) target = $region44
      $region43: #{tpu_custom_call.1} parent=5 // pred_region
        %s488 = ssub.s32 %s13, 2
        // Predicated region
        $region45: #{tpu_custom_call.1} parent=43 // pred_check
          %p489 = pneg %p131
        $region46: #{tpu_custom_call.1} parent=43 // pred_check_branch
          %491 = sbr.rel (%p489) target = $region48
        $region47: #{tpu_custom_call.1} parent=43 // pred_region
          %s492 = sand.u32 %s116, 1
          %s493 = scalar_lea.sflag [#allocation4], %s492
          %s494 = sand.u32 %s116, 1
          %s495 = smul.addr %s494, 32
          %s496 = scalar_lea.vmem [#allocation5], %s495
          %497 = dma.done %s493, 512
        $region48: #{tpu_custom_call.1} parent=43 // pred_fallthru
          _
      $region44: #{tpu_custom_call.1} parent=5 // pred_fallthru
        _
    $region6: #{tpu_custom_call.1} parent=1 // loop_footer
      %s17 = sadd.s32 1, %s13
    $region7: #{tpu_custom_call.1} parent=1 // loop_footer_branch
      %12 = sbr.rel target = $region3
    $region8: #{tpu_custom_call.1} parent=1 // loop_exit
      _
    %498 = vsyncpa [#allocation3], 1
    %s499 = scalar_lea.sflag [#allocation3], 1
    %500 = vsyncpa %s499, 1
    %501 = vsyncpa [#allocation4], 1
    %s502 = scalar_lea.sflag [#allocation4], 1
    %503 = vsyncpa %s502, 1

</llo_original>
